<compile_context>
chip_gen: v6e
topology: v6e:2x2x1
jax: 0.10.0
libtpu: 0.0.40
codegen_flags: <defaults>
</compile_context>

<pallas_src>
import functools
import math

import jax
import jax.numpy as jnp
from jax.experimental import pallas as pl
from jax.experimental.pallas import tpu as pltpu

EPS = 1e-5            # nn.LayerNorm default eps
F32 = jnp.float32
BF16 = jnp.bfloat16


# ----------------------------------------------------------------------------
# VMEM budget / tiling helpers (generation-aware)
# ----------------------------------------------------------------------------
def _query_vmem_limit():
    try:
        cap = int(pltpu.get_tpu_info().vmem_capacity_bytes)
        if cap >= 32 * 1024 * 1024:
            return int(cap * 0.85)          # leave headroom (v7x: ~54 MiB of 64)
    except Exception:
        pass
    return 48 * 1024 * 1024


_VMEM_LIMIT = _query_vmem_limit()


def _cparams(sem):
    return pltpu.CompilerParams(dimension_semantics=sem,
                                vmem_limit_bytes=_VMEM_LIMIT)


def _row_tile(n, cap=256):
    if n <= cap:
        return n
    for t in (cap, 128, 64, 32, 16, 8):
        if n % t == 0:
            return t
    return cap


def _ff_tile(f):
    cap = 2048 if _VMEM_LIMIT >= 96 * 1024 * 1024 else 512
    if f <= cap:
        return f
    for t in (2048, 1024, 512, 256, 128):
        if t <= cap and f % t == 0:
            return t
    return cap


# ----------------------------------------------------------------------------
# small in-kernel helpers
# ----------------------------------------------------------------------------
def _layernorm(x, g, b):
    mean = jnp.mean(x, axis=-1, keepdims=True)
    var = jnp.mean((x - mean) ** 2, axis=-1, keepdims=True)
    return (x - mean) * jax.lax.rsqrt(var + EPS) * g + b


def _gelu_exact(x):
    # PyTorch nn.GELU default: 0.5 * x * (1 + erf(x / sqrt(2)))
    return 0.5 * x * (1.0 + jax.lax.erf(x * (1.0 / math.sqrt(2.0))))


def _rotate_half_interleaved(t):
    # interleaved pairs: out[..., 2i] = -t[..., 2i+1]; out[..., 2i+1] = t[..., 2i]
    # Implemented as two lane shifts + select (pure VPU/XLU work, no matmul).
    # Head-boundary safe on the fused (S, E) layout because head_dim is even.
    n = t.shape[-1]
    plus1 = jnp.concatenate([t[:, 1:], t[:, :1]], axis=-1)        # t[j+1]
    minus1 = jnp.concatenate([t[:, n - 1:], t[:, :n - 1]], axis=-1)  # t[j-1]
    lane = jax.lax.broadcasted_iota(jnp.int32, t.shape, dimension=t.ndim - 1)
    return jnp.where(lane % 2 == 0, -plus1, minus1)


# ----------------------------------------------------------------------------
# Kernel A: LayerNorm + fused QKV projection + xpos rotary (scale folded in Q)
# ----------------------------------------------------------------------------
def ln_qkv_rope_kernel(x_ref, g_ref, b_ref, w_ref, cq_ref, sq_ref, ck_ref, sk_ref,
                       q_ref, k_ref, v_ref, *, E):
    xn = _layernorm(x_ref[0], g_ref[...], b_ref[...]).astype(BF16)        # (TS, E)
    qkv = jnp.dot(xn, w_ref[...], preferred_element_type=F32)             # (TS, 3E)
    q = qkv[:, 0:E]
    k = qkv[:, E:2 * E]
    v = qkv[:, 2 * E:3 * E]
    # xpos rotary: t*cos*scale + rotate_half(t)*sin*scale (tables pre-multiplied;
    # 1/sqrt(head_dim) already folded into cq/sq).
    q = q * cq_ref[...] + _rotate_half_interleaved(q) * sq_ref[...]
    k = k * ck_ref[...] + _rotate_half_interleaved(k) * sk_ref[...]
    q_ref[0] = q.astype(BF16)
    k_ref[0] = k.astype(BF16)
    v_ref[0] = v.astype(BF16)


def ln_qkv_rope(x, g, b, w_qkv, cq, sq, ck, sk):
    B, S, E = x.shape
    TS = _row_tile(S)
    blk = pl.BlockSpec((1, TS, E), lambda bi, si: (bi, si, 0))
    tab = pl.BlockSpec((TS, E), lambda bi, si: (si, 0))
    vec = pl.BlockSpec((1, E), lambda bi, si: (0, 0))
    wsp = pl.BlockSpec((E, 3 * E), lambda bi, si: (0, 0))
    return pl.pallas_call(
        functools.partial(ln_qkv_rope_kernel, E=E),
        out_shape=tuple(jax.ShapeDtypeStruct((B, S, E), BF16) for _ in range(3)),
        grid=(B, pl.cdiv(S, TS)),
        in_specs=[blk, vec, vec, wsp, tab, tab, tab, tab],
        out_specs=(blk, blk, blk),
        compiler_params=_cparams(("parallel", "parallel")),
    )(x, g, b, w_qkv, cq, sq, ck, sk)


# ----------------------------------------------------------------------------
# Kernel B/E: attention core, grid (B, H, q-tiles) on head-major (B,H,S,D) bf16
# ----------------------------------------------------------------------------
def attn_core_kernel(q_ref, k_ref, v_ref, o_ref):
    q = q_ref[0, 0]                                  # (TQ, D) bf16 (scale folded)
    k = k_ref[0, 0]                                  # (Sk, D) bf16
    v = v_ref[0, 0]                                  # (Sk, D) bf16
    s = jnp.einsum("qd,kd->qk", q, k, preferred_element_type=F32)
    s = s - jnp.max(s, axis=-1, keepdims=True)
    p = jnp.exp(s)
    p = p * pl.reciprocal(jnp.sum(p, axis=-1, keepdims=True), approx=True)
    o_ref[0, 0] = jnp.dot(p.astype(BF16), v, preferred_element_type=F32).astype(BF16)


def mha_core(qh, kh, vh):
    B, H, Sq, D = qh.shape
    Sk = kh.shape[2]
    TQ = _row_tile(Sq)
    q_spec = pl.BlockSpec((1, 1, TQ, D), lambda b, h, i: (b, h, i, 0))
    kv_spec = pl.BlockSpec((1, 1, Sk, D), lambda b, h, i: (b, h, 0, 0))
    return pl.pallas_call(
        attn_core_kernel,
        out_shape=jax.ShapeDtypeStruct((B, H, Sq, D), BF16),
        grid=(B, H, pl.cdiv(Sq, TQ)),
        in_specs=[q_spec, kv_spec, kv_spec],
        out_specs=q_spec,
        compiler_params=_cparams(("parallel", "parallel", "parallel")),
    )(qh, kh, vh)


# ----------------------------------------------------------------------------
# Kernel C: self-attn out-proj + bias + residual + LayerNorm2 + cross-Q proj
# ----------------------------------------------------------------------------
def oproj_ln_proj_kernel(a_ref, x_ref, wo_ref, bo_ref, g_ref, b_ref, wq_ref, bq_ref,
                         xnew_ref, q_ref):
    xnew = x_ref[...] + bo_ref[...] + jnp.dot(a_ref[...], wo_ref[...],
                                              preferred_element_type=F32)
    xnew_ref[...] = xnew
    xn = _layernorm(xnew, g_ref[...], b_ref[...]).astype(BF16)
    q_ref[...] = (jnp.dot(xn, wq_ref[...], preferred_element_type=F32)
                  + bq_ref[...]).astype(BF16)


def oproj_ln_proj(a2, x2, wo, bo, g, b, wq, bq):
    M, E = x2.shape
    TM = _row_tile(M)
    row = pl.BlockSpec((TM, E), lambda i: (i, 0))
    vec = pl.BlockSpec((1, E), lambda i: (0, 0))
    wsp = pl.BlockSpec((E, E), lambda i: (0, 0))
    return pl.pallas_call(
        oproj_ln_proj_kernel,
        out_shape=(jax.ShapeDtypeStruct((M, E), F32),
                   jax.ShapeDtypeStruct((M, E), BF16)),
        grid=(pl.cdiv(M, TM),),
        in_specs=[row, row, wsp, vec, vec, vec, wsp, vec],
        out_specs=(row, row),
        compiler_params=_cparams(("parallel",)),
    )(a2, x2, wo, bo, g, b, wq, bq)


# ----------------------------------------------------------------------------
# Kernel D: memory K/V projection with fused (E, 2E) weight (cross-attention)
# ----------------------------------------------------------------------------
def kv_proj_kernel(m_ref, w_ref, bias_ref, k_ref, v_ref, *, E):
    m = m_ref[...].astype(BF16)
    kv = jnp.dot(m, w_ref[...], preferred_element_type=F32) + bias_ref[...]
    k_ref[...] = kv[:, 0:E].astype(BF16)
    v_ref[...] = kv[:, E:2 * E].astype(BF16)


def kv_proj(m2, w_kv, b_kv):
    M, E = m2.shape
    TM = _row_tile(M)
    row = pl.BlockSpec((TM, E), lambda i: (i, 0))
    return pl.pallas_call(
        functools.partial(kv_proj_kernel, E=E),
        out_shape=tuple(jax.ShapeDtypeStruct((M, E), BF16) for _ in range(2)),
        grid=(pl.cdiv(M, TM),),
        in_specs=[row,
                  pl.BlockSpec((E, 2 * E), lambda i: (0, 0)),
                  pl.BlockSpec((1, 2 * E), lambda i: (0, 0))],
        out_specs=(row, row),
        compiler_params=_cparams(("parallel",)),
    )(m2, w_kv, b_kv)


# ----------------------------------------------------------------------------
# Kernel F: cross out-proj + residual + LayerNorm3 + FFN(GELU) + residual
#           (F-axis tiled; LN + out-proj hoisted to j==0 via VMEM scratch)
# ----------------------------------------------------------------------------
def oproj_ln_ffn_kernel(a_ref, x_ref, wo_ref, bo_ref, g_ref, b_ref,
                        w1_ref, b1_ref, w2_ref, b2_ref, o_ref, xn_ref):
    j = pl.program_id(1)

    @pl.when(j == 0)
    def _():
        x2 = x_ref[...] + bo_ref[...] + jnp.dot(a_ref[...], wo_ref[...],
                                                preferred_element_type=F32)
        xn_ref[...] = _layernorm(x2, g_ref[...], b_ref[...]).astype(BF16)
        o_ref[...] = x2 + b2_ref[...]

    h = jnp.dot(xn_ref[...], w1_ref[...], preferred_element_type=F32) + b1_ref[...]
    h = _gelu_exact(h)
    o_ref[...] = o_ref[...] + jnp.dot(h.astype(BF16), w2_ref[...],
                                      preferred_element_type=F32)


def oproj_ln_ffn(a2, x2, wo, bo, g, b, w1, b1, w2, b2):
    M, E = x2.shape
    F_ = w1.shape[1]
    TM = _row_tile(M)
    TF = _ff_tile(F_)
    return pl.pallas_call(
        oproj_ln_ffn_kernel,
        out_shape=jax.ShapeDtypeStruct((M, E), F32),
        grid=(pl.cdiv(M, TM), pl.cdiv(F_, TF)),
        in_specs=[
            pl.BlockSpec((TM, E), lambda i, j: (i, 0)),   # cross-attn merged (bf16)
            pl.BlockSpec((TM, E), lambda i, j: (i, 0)),   # residual stream (f32)
            pl.BlockSpec((E, E), lambda i, j: (0, 0)),    # wo (bf16)
            pl.BlockSpec((1, E), lambda i, j: (0, 0)),    # bo
            pl.BlockSpec((1, E), lambda i, j: (0, 0)),    # ln3 gamma
            pl.BlockSpec((1, E), lambda i, j: (0, 0)),    # ln3 beta
            pl.BlockSpec((E, TF), lambda i, j: (0, j)),   # w1 (bf16)
            pl.BlockSpec((1, TF), lambda i, j: (0, j)),   # b1
            pl.BlockSpec((TF, E), lambda i, j: (j, 0)),   # w2 (bf16)
            pl.BlockSpec((1, E), lambda i, j: (0, 0)),    # b2
        ],
        out_specs=pl.BlockSpec((TM, E), lambda i, j: (i, 0)),
        scratch_shapes=[pltpu.VMEM((TM, E), BF16)],
        compiler_params=_cparams(("parallel", "arbitrary")),
    )(a2, x2, wo, bo, g, b, w1, b1, w2, b2)


# ----------------------------------------------------------------------------
# Rotary (xpos) tables — RotaryEmbedding(dim=head_dim, use_xpos=True):
# theta=10000, scale_base=512, interleaved-pair rotate_half, scale concatenated.
# ----------------------------------------------------------------------------
def rotary_tables(seq_len, dim):
    theta = 10000.0
    inv_freq = 1.0 / (theta ** (jnp.arange(0, dim, 2, dtype=F32) / dim))
    t = jnp.arange(seq_len, dtype=F32)
    freqs = jnp.einsum("i,j->ij", t, inv_freq)            # (S, dim/2)
    freqs = jnp.repeat(freqs, 2, axis=-1)                 # (S, dim) interleaved
    scale_base = 512.0
    scale_vals = (jnp.arange(0, dim, 2, dtype=F32) + 0.4 * dim) / (1.4 * dim)
    power = (t - (seq_len // 2)) / scale_base             # (S,)
    scale = scale_vals[None, :] ** power[:, None]         # (S, dim/2)
    scale = jnp.concatenate([scale, scale], axis=-1)      # (S, dim)
    return jnp.cos(freqs), jnp.sin(freqs), scale


def rotary_tables_fused(seq_len, dim, nheads, q_extra_scale):
    cos, sin, sc = rotary_tables(seq_len, dim)
    tile = lambda t: jnp.tile(t, (1, nheads))              # (S, dim) -> (S, E)
    cq = tile(cos * sc * q_extra_scale)
    sq = tile(sin * sc * q_extra_scale)
    ck = tile(cos / sc)
    sk = tile(sin / sc)
    return cq, sq, ck, sk


def rotate_half(x):   # pure-JAX, used by the reference only
    x = x.reshape(*x.shape[:-1], x.shape[-1] // 2, 2)
    x1, x2 = x[..., 0], x[..., 1]
    return jnp.stack([-x2, x1], axis=-1).reshape(*x.shape[:-2], -1)


def apply_rotary(t, cos, sin, scale):
    return t * cos * scale + rotate_half(t) * sin * scale


# ----------------------------------------------------------------------------
# Head-major layout helpers (XLA ops between kernels, bf16 data)
# ----------------------------------------------------------------------------
def _to_heads(t, H):
    B, S, E = t.shape
    D = E // H
    return t.reshape(B, S, H, D).transpose(0, 2, 1, 3)     # (B, H, S, D)


def _from_heads(t):
    B, H, S, D = t.shape
    return t.transpose(0, 2, 1, 3).reshape(B, S, H * D)    # (B, S, E)


# ----------------------------------------------------------------------------
# Parameter preparation: cast weights to bf16 once, fuse QKV / KV, fold scales
# ----------------------------------------------------------------------------
def prepare_params(p):
    E = p["sa_wq"].shape[0]
    H = p["nhead"]
    D = E // H
    inv = 1.0 / math.sqrt(D)
    kp = {
        "nhead": H,
        "sa_w_qkv": jnp.concatenate([p["sa_wq"], p["sa_wk"], p["sa_wv"]],
                                    axis=1).astype(BF16),
        "sa_wo": p["sa_wo"].astype(BF16),
        "sa_bo": p["sa_bo"].reshape(1, E),
        # 1/sqrt(D) folded into the cross-attn Q projection
        "ca_wq": (p["ca_wq"] * inv).astype(BF16),
        "ca_bq": (p["ca_bq"] * inv).reshape(1, E),
        "ca_w_kv": jnp.concatenate([p["ca_wk"], p["ca_wv"]], axis=1).astype(BF16),
        "ca_b_kv": jnp.concatenate([p["ca_bk"], p["ca_bv"]]).reshape(1, 2 * E),
        "ca_wo": p["ca_wo"].astype(BF16),
        "ca_bo": p["ca_bo"].reshape(1, E),
        "ff_w1": p["ff_w1"].astype(BF16),
        "ff_b1": p["ff_b1"].reshape(1, -1),
        "ff_w2": p["ff_w2"].astype(BF16),
        "ff_b2": p["ff_b2"].reshape(1, E),
    }
    for i in (1, 2, 3):
        kp[f"ln{i}_g"] = p[f"ln{i}_g"].reshape(1, E)
        kp[f"ln{i}_b"] = p[f"ln{i}_b"].reshape(1, E)
    return kp


# ----------------------------------------------------------------------------
# TransformerDecoderLayer forward (eval mode)
# ----------------------------------------------------------------------------
def decoder_layer_forward(kp, tgt, memory):
    B, St, E = tgt.shape
    Sm = memory.shape[1]
    H = kp["nhead"]
    D = E // H

    # rotary tables (seq-position dependent); 1/sqrt(D) folded into Q tables
    cq, sq, ck, sk = rotary_tables_fused(St, D, H, 1.0 / math.sqrt(D))

    # ---- self-attention block: x + fc_out(SDPA(rope(q), rope(k), v)) -----
    q, k, v = ln_qkv_rope(tgt, kp["ln1_g"], kp["ln1_b"], kp["sa_w_qkv"],
                          cq, sq, ck, sk)                          # bf16 (B,St,E)
    ah = mha_core(_to_heads(q, H), _to_heads(k, H), _to_heads(v, H))  # (B,H,St,D)
    a2 = _from_heads(ah).reshape(B * St, E)                        # bf16

    # ---- out-proj + residual + norm2 + cross-attn Q projection ----------
    x_new, q_ca = oproj_ln_proj(a2, tgt.reshape(B * St, E),
                                kp["sa_wo"], kp["sa_bo"],
                                kp["ln2_g"], kp["ln2_b"],
                                kp["ca_wq"], kp["ca_bq"])

    # ---- memory K/V projections ------------------------------------------
    k_m, v_m = kv_proj(memory.reshape(B * Sm, E), kp["ca_w_kv"], kp["ca_b_kv"])

    # ---- cross-attention core ---------------------------------------------
    ch = mha_core(_to_heads(q_ca.reshape(B, St, E), H),
                  _to_heads(k_m.reshape(B, Sm, E), H),
                  _to_heads(v_m.reshape(B, Sm, E), H))
    c2 = _from_heads(ch).reshape(B * St, E)                        # bf16

    # ---- out-proj + residual + norm3 + FFN + residual ---------------------
    out = oproj_ln_ffn(c2, x_new,
                       kp["ca_wo"], kp["ca_bo"], kp["ln3_g"], kp["ln3_b"],
                       kp["ff_w1"], kp["ff_b1"], kp["ff_w2"], kp["ff_b2"])
    return out.reshape(B, St, E)


# ----------------------------------------------------------------------------
# Pure-JAX f32 reference (same math, no Pallas) for correctness check
# ----------------------------------------------------------------------------
def reference_forward(p, tgt, memory):
    B, St, E = tgt.shape
    H = p["nhead"]
    D = E // H

    def ln(x, g, b):
        m = x.mean(-1, keepdims=True)
        v = ((x - m) ** 2).mean(-1, keepdims=True)
        return (x - m) / jnp.sqrt(v + EPS) * g + b

    def heads(x):
        return x.reshape(B, -1, H, D).transpose(0, 2, 1, 3)

    def unheads(x):
        return x.transpose(0, 2, 1, 3).reshape(B, -1, E)

    def sdpa(q, k, v):
        s = jnp.einsum("bhqd,bhkd->bhqk", q, k) / math.sqrt(D)
        return jnp.einsum("bhqk,bhkd->bhqd", jax.nn.softmax(s, axis=-1), v)

    x = tgt
    xn = ln(x, p["ln1_g"], p["ln1_b"])
    q, k, v = heads(xn @ p["sa_wq"]), heads(xn @ p["sa_wk"]), heads(xn @ p["sa_wv"])
    cos, sin, sc = rotary_tables(St, D)
    q = apply_rotary(q, cos, sin, sc)
    k = apply_rotary(k, cos, sin, 1.0 / sc)
    x = x + unheads(sdpa(q, k, v)) @ p["sa_wo"] + p["sa_bo"]

    xn = ln(x, p["ln2_g"], p["ln2_b"])
    q = heads(xn @ p["ca_wq"] + p["ca_bq"])
    k = heads(memory @ p["ca_wk"] + p["ca_bk"])
    v = heads(memory @ p["ca_wv"] + p["ca_bv"])
    x = x + unheads(sdpa(q, k, v)) @ p["ca_wo"] + p["ca_bo"]

    xn = ln(x, p["ln3_g"], p["ln3_b"])
    h = jax.nn.gelu(xn @ p["ff_w1"] + p["ff_b1"], approximate=False)
    x = x + h @ p["ff_w2"] + p["ff_b2"]
    return x


# ----------------------------------------------------------------------------
# Deterministic parameter init (shapes per module __init__; synthetic values)
# ----------------------------------------------------------------------------
def init_params(key, E, H, FF):
    ks = jax.random.split(key, 17)

    def w(k, shape, s=0.1):
        return jax.random.normal(k, shape, F32) * s

    p = {"nhead": H}
    # custom MultiheadAttention (self-attn): q/k/v no bias, fc_out with bias
    p["sa_wq"] = w(ks[0], (E, E))
    p["sa_wk"] = w(ks[1], (E, E))
    p["sa_wv"] = w(ks[2], (E, E))
    p["sa_wo"] = w(ks[3], (E, E))
    p["sa_bo"] = w(ks[4], (E,))
    # nn.MultiheadAttention (cross-attn): in_proj (with bias) + out_proj
    p["ca_wq"] = w(ks[5], (E, E))
    p["ca_wk"] = w(ks[6], (E, E))
    p["ca_wv"] = w(ks[7], (E, E))
    p["ca_bq"] = w(ks[8], (E,))
    p["ca_bk"] = w(ks[9], (E,))
    p["ca_bv"] = w(ks[10], (E,))
    p["ca_wo"] = w(ks[11], (E, E))
    p["ca_bo"] = w(ks[12], (E,))
    # ff_out: Linear(E, FF) -> GELU -> Linear(FF, E)
    p["ff_w1"] = w(ks[13], (E, FF))
    p["ff_b1"] = w(ks[14], (FF,))
    p["ff_w2"] = w(ks[15], (FF, E))
    p["ff_b2"] = w(ks[16], (E,))
    # LayerNorms (default init: ones / zeros)
    for i in (1, 2, 3):
        p[f"ln{i}_g"] = jnp.ones((E,), F32)
        p[f"ln{i}_b"] = jnp.zeros((E,), F32)
    return p


if __name__ == "__main__":
    B, S_T, S_M, E, H, FF = 2, 8, 8, 32, 4, 64
    key = jax.random.PRNGKey(0)
    k_p, k_t, k_m = jax.random.split(key, 3)
    params = init_params(k_p, E, H, FF)
    kparams = prepare_params(params)
    tgt = jax.random.normal(k_t, (B, S_T, E), F32)
    memory = jax.random.normal(k_m, (B, S_M, E), F32)

    out = decoder_layer_forward(kparams, tgt, memory)
    out = jax.block_until_ready(out)

    ref = reference_forward(params, tgt, memory)
    assert out.shape == (B, S_T, E)
    assert bool(jnp.allclose(out, ref, atol=2e-2, rtol=2e-2)), "mismatch vs reference"
    print("KERNEL_OK")
</pallas_src>

<mosaic_0001>
module attributes {stable_mosaic.version = 11 : i64} {
  func.func @ln_qkv_rope_kernel(%arg0: i32, %arg1: i32, %arg2: memref<1x8x32xf32, #tpu.memory_space<vmem>>, %arg3: memref<1x32xf32, #tpu.memory_space<vmem>>, %arg4: memref<1x32xf32, #tpu.memory_space<vmem>>, %arg5: memref<32x96xbf16, #tpu.memory_space<vmem>>, %arg6: memref<8x32xf32, #tpu.memory_space<vmem>>, %arg7: memref<8x32xf32, #tpu.memory_space<vmem>>, %arg8: memref<8x32xf32, #tpu.memory_space<vmem>>, %arg9: memref<8x32xf32, #tpu.memory_space<vmem>>, %arg10: memref<1x8x32xbf16, #tpu.memory_space<vmem>>, %arg11: memref<1x8x32xbf16, #tpu.memory_space<vmem>>, %arg12: memref<1x8x32xbf16, #tpu.memory_space<vmem>>) attributes {dimension_semantics = [#tpu.dimension_semantics<parallel>, #tpu.dimension_semantics<parallel>], iteration_bounds = array<i64: 2, 1>, scalar_prefetch = 0 : i64, scratch_operands = 0 : i64, tpu.core_type = #tpu.core_type<tc>, window_params = [{transform_indices = @transform_0, window_bounds = array<i64: 1, 8, 32>}, {pipeline_mode = #tpu.pipeline_mode<synchronous>, transform_indices = @transform_1, window_bounds = array<i64: 1, 32>}, {pipeline_mode = #tpu.pipeline_mode<synchronous>, transform_indices = @transform_2, window_bounds = array<i64: 1, 32>}, {pipeline_mode = #tpu.pipeline_mode<synchronous>, transform_indices = @transform_3, window_bounds = array<i64: 32, 96>}, {transform_indices = @transform_4, window_bounds = array<i64: 8, 32>}, {transform_indices = @transform_5, window_bounds = array<i64: 8, 32>}, {transform_indices = @transform_6, window_bounds = array<i64: 8, 32>}, {transform_indices = @transform_7, window_bounds = array<i64: 8, 32>}, {transform_indices = @transform_8, window_bounds = array<i64: 1, 8, 32>}, {transform_indices = @transform_9, window_bounds = array<i64: 1, 8, 32>}, {transform_indices = @transform_10, window_bounds = array<i64: 1, 8, 32>}]} {
    %c0 = arith.constant 0 : index
    %c0_0 = arith.constant 0 : index
    %c0_1 = arith.constant 0 : index
    %0 = vector.load %arg2[%c0, %c0_0, %c0_1] : memref<1x8x32xf32, #tpu.memory_space<vmem>>, vector<1x8x32xf32>
    %1 = vector.shape_cast %0 : vector<1x8x32xf32> to vector<8x32xf32>
    %c0_2 = arith.constant 0 : index
    %c0_3 = arith.constant 0 : index
    %2 = vector.load %arg3[%c0_2, %c0_3] : memref<1x32xf32, #tpu.memory_space<vmem>>, vector<1x32xf32>
    %c0_4 = arith.constant 0 : index
    %c0_5 = arith.constant 0 : index
    %3 = vector.load %arg4[%c0_4, %c0_5] : memref<1x32xf32, #tpu.memory_space<vmem>>, vector<1x32xf32>
    %cst = arith.constant dense<0.000000e+00> : vector<8xf32>
    %4 = vector.multi_reduction <add>, %1, %cst [1] : vector<8x32xf32> to vector<8xf32>
    %5 = vector.shape_cast %4 : vector<8xf32> to vector<8x1xf32>
    %cst_6 = arith.constant 3.200000e+01 : f32
    %6 = vector.broadcast %cst_6 : f32 to vector<8x1xf32>
    %7 = arith.divf %5, %6 : vector<8x1xf32>
    %8 = vector.broadcast %7 : vector<8x1xf32> to vector<8x32xf32>
    %9 = arith.subf %1, %8 : vector<8x32xf32>
    %10 = arith.mulf %9, %9 : vector<8x32xf32>
    %cst_7 = arith.constant dense<0.000000e+00> : vector<8xf32>
    %11 = vector.multi_reduction <add>, %10, %cst_7 [1] : vector<8x32xf32> to vector<8xf32>
    %12 = vector.shape_cast %11 : vector<8xf32> to vector<8x1xf32>
    %cst_8 = arith.constant 3.200000e+01 : f32
    %13 = vector.broadcast %cst_8 : f32 to vector<8x1xf32>
    %14 = arith.divf %12, %13 : vector<8x1xf32>
    %15 = vector.broadcast %7 : vector<8x1xf32> to vector<8x32xf32>
    %16 = arith.subf %1, %15 : vector<8x32xf32>
    %cst_9 = arith.constant 9.99999974E-6 : f32
    %17 = vector.broadcast %cst_9 : f32 to vector<8x1xf32>
    %18 = arith.addf %14, %17 : vector<8x1xf32>
    %19 = math.rsqrt %18 : vector<8x1xf32>
    %20 = vector.broadcast %19 : vector<8x1xf32> to vector<8x32xf32>
    %21 = arith.mulf %16, %20 : vector<8x32xf32>
    %22 = vector.broadcast %2 : vector<1x32xf32> to vector<8x32xf32>
    %23 = arith.mulf %21, %22 : vector<8x32xf32>
    %24 = vector.broadcast %3 : vector<1x32xf32> to vector<8x32xf32>
    %25 = arith.addf %23, %24 : vector<8x32xf32>
    %26 = arith.truncf %25 : vector<8x32xf32> to vector<8x32xbf16>
    %c0_10 = arith.constant 0 : index
    %c0_11 = arith.constant 0 : index
    %27 = vector.load %arg5[%c0_10, %c0_11] : memref<32x96xbf16, #tpu.memory_space<vmem>>, vector<32x96xbf16>
    %cst_12 = arith.constant dense<0.000000e+00> : vector<8x96xf32>
    %28 = tpu.matmul %26, %27, %cst_12 {dimension_numbers = #tpu.dot_dimension_numbers<[1], [0], [0], [1], [0, 0, 1, 1], [], []>} : vector<8x32xbf16>, vector<32x96xbf16>, vector<8x96xf32> -> vector<8x96xf32>
    %29 = vector.extract_strided_slice %28 {offsets = [0, 0], sizes = [8, 32], strides = [1, 1]} : vector<8x96xf32> to vector<8x32xf32>
    %30 = vector.extract_strided_slice %28 {offsets = [0, 32], sizes = [8, 32], strides = [1, 1]} : vector<8x96xf32> to vector<8x32xf32>
    %31 = vector.extract_strided_slice %28 {offsets = [0, 64], sizes = [8, 32], strides = [1, 1]} : vector<8x96xf32> to vector<8x32xf32>
    %c0_13 = arith.constant 0 : index
    %c0_14 = arith.constant 0 : index
    %32 = vector.load %arg6[%c0_13, %c0_14] : memref<8x32xf32, #tpu.memory_space<vmem>>, vector<8x32xf32>
    %33 = arith.mulf %29, %32 : vector<8x32xf32>
    %34 = vector.extract_strided_slice %29 {offsets = [0, 1], sizes = [8, 31], strides = [1, 1]} : vector<8x32xf32> to vector<8x31xf32>
    %35 = vector.extract_strided_slice %29 {offsets = [0, 0], sizes = [8, 1], strides = [1, 1]} : vector<8x32xf32> to vector<8x1xf32>
    %36 = tpu.concatenate %34, %35 in 1 : vector<8x31xf32>, vector<8x1xf32> -> vector<8x32xf32>
    %37 = vector.extract_strided_slice %29 {offsets = [0, 31], sizes = [8, 1], strides = [1, 1]} : vector<8x32xf32> to vector<8x1xf32>
    %38 = vector.extract_strided_slice %29 {offsets = [0, 0], sizes = [8, 31], strides = [1, 1]} : vector<8x32xf32> to vector<8x31xf32>
    %39 = tpu.concatenate %37, %38 in 1 : vector<8x1xf32>, vector<8x31xf32> -> vector<8x32xf32>
    %40 = tpu.iota {dimensions = array<i32: 1>} : vector<8x32xi32>
    %c2_i32 = arith.constant 2 : i32
    %c0_i32 = arith.constant 0 : i32
    %41 = arith.cmpi eq, %c2_i32, %c0_i32 : i32
    %c1_i32 = arith.constant 1 : i32
    %42 = arith.select %41, %c1_i32, %c2_i32 : i32
    %43 = vector.broadcast %42 : i32 to vector<8x32xi32>
    %44 = arith.remsi %40, %43 : vector<8x32xi32>
    %c0_i32_15 = arith.constant 0 : i32
    %45 = vector.broadcast %c0_i32_15 : i32 to vector<8x32xi32>
    %46 = arith.cmpi ne, %44, %45 : vector<8x32xi32>
    %c0_i32_16 = arith.constant 0 : i32
    %47 = vector.broadcast %c0_i32_16 : i32 to vector<8x32xi32>
    %48 = arith.cmpi slt, %44, %47 : vector<8x32xi32>
    %c0_i32_17 = arith.constant 0 : i32
    %49 = arith.cmpi slt, %42, %c0_i32_17 : i32
    %50 = vector.broadcast %49 : i1 to vector<8x32xi1>
    %51 = vector.broadcast %50 : vector<8x32xi1> to vector<8x32xi1>
    %52 = arith.xori %48, %51 : vector<8x32xi1>
    %53 = arith.andi %52, %46 : vector<8x32xi1>
    %54 = vector.broadcast %42 : i32 to vector<8x32xi32>
    %55 = arith.addi %44, %54 : vector<8x32xi32>
    %56 = arith.select %53, %55, %44 : vector<8x32xi1>, vector<8x32xi32>
    %c0_i32_18 = arith.constant 0 : i32
    %57 = vector.broadcast %c0_i32_18 : i32 to vector<8x32xi32>
    %58 = arith.cmpi eq, %56, %57 : vector<8x32xi32>
    %cst_19 = arith.constant 0.000000e+00 : f32
    %59 = vector.broadcast %cst_19 : f32 to vector<8x32xf32>
    %60 = arith.subf %59, %36 : vector<8x32xf32>
    %61 = arith.select %58, %60, %39 : vector<8x32xi1>, vector<8x32xf32>
    %c0_20 = arith.constant 0 : index
    %c0_21 = arith.constant 0 : index
    %62 = vector.load %arg7[%c0_20, %c0_21] : memref<8x32xf32, #tpu.memory_space<vmem>>, vector<8x32xf32>
    %63 = arith.mulf %61, %62 : vector<8x32xf32>
    %64 = arith.addf %33, %63 : vector<8x32xf32>
    %c0_22 = arith.constant 0 : index
    %c0_23 = arith.constant 0 : index
    %65 = vector.load %arg8[%c0_22, %c0_23] : memref<8x32xf32, #tpu.memory_space<vmem>>, vector<8x32xf32>
    %66 = arith.mulf %30, %65 : vector<8x32xf32>
    %67 = vector.extract_strided_slice %30 {offsets = [0, 1], sizes = [8, 31], strides = [1, 1]} : vector<8x32xf32> to vector<8x31xf32>
    %68 = vector.extract_strided_slice %30 {offsets = [0, 0], sizes = [8, 1], strides = [1, 1]} : vector<8x32xf32> to vector<8x1xf32>
    %69 = tpu.concatenate %67, %68 in 1 : vector<8x31xf32>, vector<8x1xf32> -> vector<8x32xf32>
    %70 = vector.extract_strided_slice %30 {offsets = [0, 31], sizes = [8, 1], strides = [1, 1]} : vector<8x32xf32> to vector<8x1xf32>
    %71 = vector.extract_strided_slice %30 {offsets = [0, 0], sizes = [8, 31], strides = [1, 1]} : vector<8x32xf32> to vector<8x31xf32>
    %72 = tpu.concatenate %70, %71 in 1 : vector<8x1xf32>, vector<8x31xf32> -> vector<8x32xf32>
    %73 = tpu.iota {dimensions = array<i32: 1>} : vector<8x32xi32>
    %c2_i32_24 = arith.constant 2 : i32
    %c0_i32_25 = arith.constant 0 : i32
    %74 = arith.cmpi eq, %c2_i32_24, %c0_i32_25 : i32
    %c1_i32_26 = arith.constant 1 : i32
    %75 = arith.select %74, %c1_i32_26, %c2_i32_24 : i32
    %76 = vector.broadcast %75 : i32 to vector<8x32xi32>
    %77 = arith.remsi %73, %76 : vector<8x32xi32>
    %c0_i32_27 = arith.constant 0 : i32
    %78 = vector.broadcast %c0_i32_27 : i32 to vector<8x32xi32>
    %79 = arith.cmpi ne, %77, %78 : vector<8x32xi32>
    %c0_i32_28 = arith.constant 0 : i32
    %80 = vector.broadcast %c0_i32_28 : i32 to vector<8x32xi32>
    %81 = arith.cmpi slt, %77, %80 : vector<8x32xi32>
    %c0_i32_29 = arith.constant 0 : i32
    %82 = arith.cmpi slt, %75, %c0_i32_29 : i32
    %83 = vector.broadcast %82 : i1 to vector<8x32xi1>
    %84 = vector.broadcast %83 : vector<8x32xi1> to vector<8x32xi1>
    %85 = arith.xori %81, %84 : vector<8x32xi1>
    %86 = arith.andi %85, %79 : vector<8x32xi1>
    %87 = vector.broadcast %75 : i32 to vector<8x32xi32>
    %88 = arith.addi %77, %87 : vector<8x32xi32>
    %89 = arith.select %86, %88, %77 : vector<8x32xi1>, vector<8x32xi32>
    %c0_i32_30 = arith.constant 0 : i32
    %90 = vector.broadcast %c0_i32_30 : i32 to vector<8x32xi32>
    %91 = arith.cmpi eq, %89, %90 : vector<8x32xi32>
    %cst_31 = arith.constant 0.000000e+00 : f32
    %92 = vector.broadcast %cst_31 : f32 to vector<8x32xf32>
    %93 = arith.subf %92, %69 : vector<8x32xf32>
    %94 = arith.select %91, %93, %72 : vector<8x32xi1>, vector<8x32xf32>
    %c0_32 = arith.constant 0 : index
    %c0_33 = arith.constant 0 : index
    %95 = vector.load %arg9[%c0_32, %c0_33] : memref<8x32xf32, #tpu.memory_space<vmem>>, vector<8x32xf32>
    %96 = arith.mulf %94, %95 : vector<8x32xf32>
    %97 = arith.addf %66, %96 : vector<8x32xf32>
    %98 = arith.truncf %64 : vector<8x32xf32> to vector<8x32xbf16>
    %c0_34 = arith.constant 0 : index
    %c0_35 = arith.constant 0 : index
    %c0_36 = arith.constant 0 : index
    %99 = vector.load %arg10[%c0_34, %c0_35, %c0_36] : memref<1x8x32xbf16, #tpu.memory_space<vmem>>, vector<1x8x32xbf16>
    %100 = vector.shape_cast %99 : vector<1x8x32xbf16> to vector<8x32xbf16>
    %101 = vector.shape_cast %98 : vector<8x32xbf16> to vector<1x8x32xbf16>
    tpu.vector_store %arg10[%c0_34, %c0_35, %c0_36], %101 {strides = array<i32>} : memref<1x8x32xbf16, #tpu.memory_space<vmem>>, vector<1x8x32xbf16>,
    %102 = arith.truncf %97 : vector<8x32xf32> to vector<8x32xbf16>
    %c0_37 = arith.constant 0 : index
    %c0_38 = arith.constant 0 : index
    %c0_39 = arith.constant 0 : index
    %103 = vector.load %arg11[%c0_37, %c0_38, %c0_39] : memref<1x8x32xbf16, #tpu.memory_space<vmem>>, vector<1x8x32xbf16>
    %104 = vector.shape_cast %103 : vector<1x8x32xbf16> to vector<8x32xbf16>
    %105 = vector.shape_cast %102 : vector<8x32xbf16> to vector<1x8x32xbf16>
    tpu.vector_store %arg11[%c0_37, %c0_38, %c0_39], %105 {strides = array<i32>} : memref<1x8x32xbf16, #tpu.memory_space<vmem>>, vector<1x8x32xbf16>,
    %106 = arith.truncf %31 : vector<8x32xf32> to vector<8x32xbf16>
    %c0_40 = arith.constant 0 : index
    %c0_41 = arith.constant 0 : index
    %c0_42 = arith.constant 0 : index
    %107 = vector.load %arg12[%c0_40, %c0_41, %c0_42] : memref<1x8x32xbf16, #tpu.memory_space<vmem>>, vector<1x8x32xbf16>
    %108 = vector.shape_cast %107 : vector<1x8x32xbf16> to vector<8x32xbf16>
    %109 = vector.shape_cast %106 : vector<8x32xbf16> to vector<1x8x32xbf16>
    tpu.vector_store %arg12[%c0_40, %c0_41, %c0_42], %109 {strides = array<i32>} : memref<1x8x32xbf16, #tpu.memory_space<vmem>>, vector<1x8x32xbf16>,
    return
  }
  func.func @transform_0(%arg0: i32, %arg1: i32) -> (i32, i32, i32) {
    %c0_i32 = arith.constant 0 : i32
    %c0_i32_0 = arith.constant 0 : i32
    return %arg0, %arg1, %c0_i32 : i32, i32, i32
  }
  func.func @transform_1(%arg0: i32, %arg1: i32) -> (i32, i32) {
    %c0_i32 = arith.constant 0 : i32
    %c0_i32_0 = arith.constant 0 : i32
    %c0_i32_1 = arith.constant 0 : i32
    return %c0_i32, %c0_i32_0 : i32, i32
  }
  func.func @transform_2(%arg0: i32, %arg1: i32) -> (i32, i32) {
    %c0_i32 = arith.constant 0 : i32
    %c0_i32_0 = arith.constant 0 : i32
    %c0_i32_1 = arith.constant 0 : i32
    return %c0_i32, %c0_i32_0 : i32, i32
  }
  func.func @transform_3(%arg0: i32, %arg1: i32) -> (i32, i32) {
    %c0_i32 = arith.constant 0 : i32
    %c0_i32_0 = arith.constant 0 : i32
    %c0_i32_1 = arith.constant 0 : i32
    return %c0_i32, %c0_i32_0 : i32, i32
  }
  func.func @transform_4(%arg0: i32, %arg1: i32) -> (i32, i32) {
    %c0_i32 = arith.constant 0 : i32
    %c0_i32_0 = arith.constant 0 : i32
    return %arg1, %c0_i32 : i32, i32
  }
  func.func @transform_5(%arg0: i32, %arg1: i32) -> (i32, i32) {
    %c0_i32 = arith.constant 0 : i32
    %c0_i32_0 = arith.constant 0 : i32
    return %arg1, %c0_i32 : i32, i32
  }
  func.func @transform_6(%arg0: i32, %arg1: i32) -> (i32, i32) {
    %c0_i32 = arith.constant 0 : i32
    %c0_i32_0 = arith.constant 0 : i32
    return %arg1, %c0_i32 : i32, i32
  }
  func.func @transform_7(%arg0: i32, %arg1: i32) -> (i32, i32) {
    %c0_i32 = arith.constant 0 : i32
    %c0_i32_0 = arith.constant 0 : i32
    return %arg1, %c0_i32 : i32, i32
  }
  func.func @transform_8(%arg0: i32, %arg1: i32) -> (i32, i32, i32) {
    %c0_i32 = arith.constant 0 : i32
    %c0_i32_0 = arith.constant 0 : i32
    return %arg0, %arg1, %c0_i32 : i32, i32, i32
  }
  func.func @transform_9(%arg0: i32, %arg1: i32) -> (i32, i32, i32) {
    %c0_i32 = arith.constant 0 : i32
    %c0_i32_0 = arith.constant 0 : i32
    return %arg0, %arg1, %c0_i32 : i32, i32, i32
  }
  func.func @transform_10(%arg0: i32, %arg1: i32) -> (i32, i32, i32) {
    %c0_i32 = arith.constant 0 : i32
    %c0_i32_0 = arith.constant 0 : i32
    return %arg0, %arg1, %c0_i32 : i32, i32, i32
  }
}

</mosaic_0001>

<llo_original>
// kernel: tpu_custom_call.1
$region0: #{tpu_custom_call.1}
  #allocation0 [shape = 'u32[]', space=smem, size = 0x4, offset = 0x4, fixed_abs, tag = 'smem constant byte address 0x4 - core index']
  #allocation1 [shape = 'u32[144,128]{1,0:T(1,128)}', space=vmem, size = 0x12000, scoped, tag = 'internal scratch']
  %s0 = inlined_call_operand.hbm [shape: f32[2,8,32], index: 0, kind: input, shape index: {}]
  %s1 = inlined_call_operand.vmem [shape: f32[1,32], index: 1, kind: input, shape index: {}]
  %s2 = inlined_call_operand.hbm [shape: f32[1,32], index: 2, kind: input, shape index: {}]
  %s3 = inlined_call_operand.hbm [shape: bf16[32,96], index: 3, kind: input, shape index: {}]
  %s4 = inlined_call_operand.hbm [shape: f32[8,32], index: 4, kind: input, shape index: {}]
  %s5 = inlined_call_operand.vmem [shape: f32[8,32], index: 5, kind: input, shape index: {}]
  %s6 = inlined_call_operand.hbm [shape: f32[8,32], index: 6, kind: input, shape index: {}]
  %s7 = inlined_call_operand.hbm [shape: f32[8,32], index: 7, kind: input, shape index: {}]
  %s8 = inlined_call_operand.hbm [shape: bf16[2,8,32], index: 8, kind: output, shape index: {0}]
  %s9 = inlined_call_operand.hbm [shape: bf16[2,8,32], index: 9, kind: output, shape index: {1}]
  %s10 = inlined_call_operand.hbm [shape: bf16[2,8,32], index: 10, kind: output, shape index: {2}]
  %11 = xla_tuple %s8, %s9, %s10
  %s12 = sld [smem:[#allocation0]]
  $region105: #{tpu_custom_call.1} parent=0
    _
  %s14 = ssub.s32 1, %s12
  %s15 = scalar_select 0, %s14, %s12
  $region1: #{tpu_custom_call.1} parent=0
    #allocation2 [shape = 'u8[8192]{0}', space=vmem, size = 0x2000, scoped, tag = 'input window, operand 0']
    #allocation3 [shape = 's32[2]{0}', space=sflag, size = 0x8, scoped, tag = 'scoped memory for tpu_custom_call.1']
    #allocation4 [shape = 's32[2]{0}', space=sflag, size = 0x8, scoped, tag = 'scoped memory for tpu_custom_call.1']
    #allocation5 [shape = 'u8[512]{0}', space=vmem, size = 0x400, scoped, tag = 'input window, operand 2, single buffered']
    #allocation6 [shape = 's32[1]{0}', space=sflag, size = 0x4, scoped, tag = 'scoped memory for tpu_custom_call.1']
    #allocation7 [shape = 'u8[8192]{0}', space=vmem, size = 0x2000, scoped, tag = 'input window, operand 3, single buffered']
    #allocation8 [shape = 'u8[4096]{0}', space=vmem, size = 0x1000, scoped, tag = 'input window, operand 4, single buffered']
    #allocation9 [shape = 's32[1]{0}', space=sflag, size = 0x4, scoped, tag = 'scoped memory for tpu_custom_call.1']
    #allocation10 [shape = 'u8[4096]{0}', space=vmem, size = 0x1000, scoped, tag = 'input window, operand 6, single buffered']
    #allocation11 [shape = 'u8[4096]{0}', space=vmem, size = 0x1000, scoped, tag = 'input window, operand 7, single buffered']
    #allocation12 [shape = 's32[1]{0}', space=sflag, size = 0x4, scoped, tag = 'scoped memory for tpu_custom_call.1']
    #allocation13 [shape = 'u8[4096]{0}', space=vmem, size = 0x1000, scoped, tag = 'output window, operand 0']
    #allocation14 [shape = 'u8[4096]{0}', space=vmem, size = 0x1000, scoped, tag = 'output window, operand 1']
    #allocation15 [shape = 's32[2]{0}', space=sflag, size = 0x8, scoped, tag = 'scoped memory for tpu_custom_call.1']
    #allocation16 [shape = 'u8[4096]{0}', space=vmem, size = 0x1000, scoped, tag = 'output window, operand 2']
    %16 = vsyncpa [#allocation3], 0
    %s17 = scalar_lea.sflag [#allocation3], 1
    %18 = vsyncpa %s17, 0
    %19 = vsyncpa [#allocation6], 0
    %20 = vsyncpa [#allocation9], 0
    %21 = vsyncpa [#allocation12], 0
    %22 = vsyncpa [#allocation4], 0
    %s23 = scalar_lea.sflag [#allocation4], 1
    %24 = vsyncpa %s23, 0
    %25 = vsyncpa [#allocation15], 0
    %s26 = scalar_lea.sflag [#allocation15], 1
    %27 = vsyncpa %s26, 0
    loop: start=0, step=1, limit=4
    $region2: #{tpu_custom_call.1} parent=1 // loop_pre_header
      _
    $region3: #{tpu_custom_call.1} parent=1 // loop_header
      %s29 = sphi 0, %s33
      %p30 = scmp.ge.s32.totalorder %s29, 4
      %s36 = sphi 0, %s48
      %s37 = sphi 0, %s44
      %s38 = sphi 0, %s36
      %s39 = sphi 0, %s37
      %s40 = sphi 0, %s38
      %s41 = sphi 0, %s39
      %s53 = sphi 0, %s55
      %s56 = sphi 0, %s53
      %s57 = sphi 0, %s56
      %s73 = sphi 0, %s57
      %s77 = sphi 0, %s77
      %s79 = sphi 0, %s77
      %s80 = sphi 0, %s79
      %s94 = sphi 0, %s80
      %s98 = sphi 0, %s98
      %s100 = sphi 0, %s98
      %s101 = sphi 0, %s100
      %s115 = sphi 0, %s101
      %s119 = sphi 0, %s119
      %s121 = sphi 0, %s119
      %s122 = sphi 0, %s121
      %s136 = sphi 0, %s122
      %s142 = sphi 0, %s144
      %s145 = sphi 0, %s142
      %s146 = sphi 0, %s145
      %s162 = sphi 0, %s146
      %s168 = sphi 0, %s170
      %s171 = sphi 0, %s168
      %s172 = sphi 0, %s171
      %s188 = sphi 0, %s172
      %s194 = sphi 0, %s196
      %s197 = sphi 0, %s194
      %s198 = sphi 0, %s197
      %s214 = sphi 0, %s198
      %s220 = sphi 0, %s222
      %s223 = sphi 0, %s220
      %s224 = sphi 0, %s223
      %s240 = sphi 0, %s224
      %s248 = sphi 0, %s250
      %s251 = sphi 0, %s248
      %s252 = sphi 0, %s251
      %s268 = sphi 0, %s252
      %s276 = sphi 0, %s278
      %s279 = sphi 0, %s276
      %s280 = sphi 0, %s279
      %s296 = sphi 0, %s280
      %s304 = sphi 0, %s306
      %s307 = sphi 0, %s304
      %s308 = sphi 0, %s307
      %s324 = sphi 0, %s308
    $region4: #{tpu_custom_call.1} parent=1 // loop_header_branch
      %32 = sbr.rel (%p30) target = $region8
    $region5: #{tpu_custom_call.1} parent=1 // loop_body
      %s34 = ssub.s32 %s29, 1
      %s35 = ssub.s32 %s29, 2
      %s42 = sadd.s32 1, %s37
      %p43 = scmp.ge.s32.totalorder %s42, 1
      %s44 = scalar_select %p43, 0, %s42
      %s45 = sadd.s32 1, %s36
      %s46 = scalar_select %p43, %s45, %s36
      %p47 = scmp.ge.s32.totalorder %s46, 2
      %s48 = scalar_select %p47, 0, %s46
      %s49 = ssub.s32 %s36, %s48
      %s50 = ssub.s32 %s37, %s44
      %s51 = sor.u32 %s49, %s50
      %p52 = scmp.eq.s32.totalorder %s51, 0
      %s54 = sadd.s32 %s53, 1
      %s55 = scalar_select %p52, %s53, %s54
      %p58 = pneg %p52
      %p59 = scmp.eq.s32.totalorder %s29, 1
      %p60 = por %p58, %p59
      %p61 = scmp.ne.s32.totalorder %s53, %s56
      %p62 = scmp.eq.s32.totalorder %s29, 0
      %p63 = por %p61, %p62
      %p64 = scmp.ne.s32.totalorder %s53, %s56
      %p65 = scmp.eq.s32.totalorder %s34, 1
      %p66 = por %p64, %p65
      %p67 = scmp.ne.s32.totalorder %s56, %s57
      %p68 = scmp.eq.s32.totalorder %s34, 0
      %p69 = por %p67, %p68
      %p70 = scmp.ne.s32.totalorder %s56, %s57
      %p71 = scmp.eq.s32.totalorder %s35, 1
      %p72 = por %p70, %p71
      %p74 = scmp.ne.s32.totalorder %s57, %s73
      %p75 = scmp.eq.s32.totalorder %s35, 0
      %p76 = por %p74, %p75
      %s78 = sadd.s32 %s77, 1
      %p81 = scmp.eq.s32.totalorder %s29, 1
      %p82 = scmp.ne.s32.totalorder %s77, %s79
      %p83 = scmp.eq.s32.totalorder %s29, 0
      %p84 = por %p82, %p83
      %p85 = scmp.ne.s32.totalorder %s77, %s79
      %p86 = scmp.eq.s32.totalorder %s34, 1
      %p87 = por %p85, %p86
      %p88 = scmp.ne.s32.totalorder %s79, %s80
      %p89 = scmp.eq.s32.totalorder %s34, 0
      %p90 = por %p88, %p89
      %p91 = scmp.ne.s32.totalorder %s79, %s80
      %p92 = scmp.eq.s32.totalorder %s35, 1
      %p93 = por %p91, %p92
      %p95 = scmp.ne.s32.totalorder %s80, %s94
      %p96 = scmp.eq.s32.totalorder %s35, 0
      %p97 = por %p95, %p96
      %s99 = sadd.s32 %s98, 1
      %p102 = scmp.eq.s32.totalorder %s29, 1
      %p103 = scmp.ne.s32.totalorder %s98, %s100
      %p104 = scmp.eq.s32.totalorder %s29, 0
      %p105 = por %p103, %p104
      %p106 = scmp.ne.s32.totalorder %s98, %s100
      %p107 = scmp.eq.s32.totalorder %s34, 1
      %p108 = por %p106, %p107
      %p109 = scmp.ne.s32.totalorder %s100, %s101
      %p110 = scmp.eq.s32.totalorder %s34, 0
      %p111 = por %p109, %p110
      %p112 = scmp.ne.s32.totalorder %s100, %s101
      %p113 = scmp.eq.s32.totalorder %s35, 1
      %p114 = por %p112, %p113
      %p116 = scmp.ne.s32.totalorder %s101, %s115
      %p117 = scmp.eq.s32.totalorder %s35, 0
      %p118 = por %p116, %p117
      %s120 = sadd.s32 %s119, 1
      %p123 = scmp.eq.s32.totalorder %s29, 1
      %p124 = scmp.ne.s32.totalorder %s119, %s121
      %p125 = scmp.eq.s32.totalorder %s29, 0
      %p126 = por %p124, %p125
      %p127 = scmp.ne.s32.totalorder %s119, %s121
      %p128 = scmp.eq.s32.totalorder %s34, 1
      %p129 = por %p127, %p128
      %p130 = scmp.ne.s32.totalorder %s121, %s122
      %p131 = scmp.eq.s32.totalorder %s34, 0
      %p132 = por %p130, %p131
      %p133 = scmp.ne.s32.totalorder %s121, %s122
      %p134 = scmp.eq.s32.totalorder %s35, 1
      %p135 = por %p133, %p134
      %p137 = scmp.ne.s32.totalorder %s122, %s136
      %p138 = scmp.eq.s32.totalorder %s35, 0
      %p139 = por %p137, %p138
      %s140 = ssub.s32 %s37, %s44
      %p141 = scmp.eq.s32.totalorder %s140, 0
      %s143 = sadd.s32 %s142, 1
      %s144 = scalar_select %p141, %s142, %s143
      %p147 = pneg %p141
      %p148 = scmp.eq.s32.totalorder %s29, 1
      %p149 = por %p147, %p148
      %p150 = scmp.ne.s32.totalorder %s142, %s145
      %p151 = scmp.eq.s32.totalorder %s29, 0
      %p152 = por %p150, %p151
      %p153 = scmp.ne.s32.totalorder %s142, %s145
      %p154 = scmp.eq.s32.totalorder %s34, 1
      %p155 = por %p153, %p154
      %p156 = scmp.ne.s32.totalorder %s145, %s146
      %p157 = scmp.eq.s32.totalorder %s34, 0
      %p158 = por %p156, %p157
      %p159 = scmp.ne.s32.totalorder %s145, %s146
      %p160 = scmp.eq.s32.totalorder %s35, 1
      %p161 = por %p159, %p160
      %p163 = scmp.ne.s32.totalorder %s146, %s162
      %p164 = scmp.eq.s32.totalorder %s35, 0
      %p165 = por %p163, %p164
      %s166 = ssub.s32 %s37, %s44
      %p167 = scmp.eq.s32.totalorder %s166, 0
      %s169 = sadd.s32 %s168, 1
      %s170 = scalar_select %p167, %s168, %s169
      %p173 = pneg %p167
      %p174 = scmp.eq.s32.totalorder %s29, 1
      %p175 = por %p173, %p174
      %p176 = scmp.ne.s32.totalorder %s168, %s171
      %p177 = scmp.eq.s32.totalorder %s29, 0
      %p178 = por %p176, %p177
      %p179 = scmp.ne.s32.totalorder %s168, %s171
      %p180 = scmp.eq.s32.totalorder %s34, 1
      %p181 = por %p179, %p180
      %p182 = scmp.ne.s32.totalorder %s171, %s172
      %p183 = scmp.eq.s32.totalorder %s34, 0
      %p184 = por %p182, %p183
      %p185 = scmp.ne.s32.totalorder %s171, %s172
      %p186 = scmp.eq.s32.totalorder %s35, 1
      %p187 = por %p185, %p186
      %p189 = scmp.ne.s32.totalorder %s172, %s188
      %p190 = scmp.eq.s32.totalorder %s35, 0
      %p191 = por %p189, %p190
      %s192 = ssub.s32 %s37, %s44
      %p193 = scmp.eq.s32.totalorder %s192, 0
      %s195 = sadd.s32 %s194, 1
      %s196 = scalar_select %p193, %s194, %s195
      %p199 = pneg %p193
      %p200 = scmp.eq.s32.totalorder %s29, 1
      %p201 = por %p199, %p200
      %p202 = scmp.ne.s32.totalorder %s194, %s197
      %p203 = scmp.eq.s32.totalorder %s29, 0
      %p204 = por %p202, %p203
      %p205 = scmp.ne.s32.totalorder %s194, %s197
      %p206 = scmp.eq.s32.totalorder %s34, 1
      %p207 = por %p205, %p206
      %p208 = scmp.ne.s32.totalorder %s197, %s198
      %p209 = scmp.eq.s32.totalorder %s34, 0
      %p210 = por %p208, %p209
      %p211 = scmp.ne.s32.totalorder %s197, %s198
      %p212 = scmp.eq.s32.totalorder %s35, 1
      %p213 = por %p211, %p212
      %p215 = scmp.ne.s32.totalorder %s198, %s214
      %p216 = scmp.eq.s32.totalorder %s35, 0
      %p217 = por %p215, %p216
      %s218 = ssub.s32 %s37, %s44
      %p219 = scmp.eq.s32.totalorder %s218, 0
      %s221 = sadd.s32 %s220, 1
      %s222 = scalar_select %p219, %s220, %s221
      %p225 = pneg %p219
      %p226 = scmp.eq.s32.totalorder %s29, 1
      %p227 = por %p225, %p226
      %p228 = scmp.ne.s32.totalorder %s220, %s223
      %p229 = scmp.eq.s32.totalorder %s29, 0
      %p230 = por %p228, %p229
      %p231 = scmp.ne.s32.totalorder %s220, %s223
      %p232 = scmp.eq.s32.totalorder %s34, 1
      %p233 = por %p231, %p232
      %p234 = scmp.ne.s32.totalorder %s223, %s224
      %p235 = scmp.eq.s32.totalorder %s34, 0
      %p236 = por %p234, %p235
      %p237 = scmp.ne.s32.totalorder %s223, %s224
      %p238 = scmp.eq.s32.totalorder %s35, 1
      %p239 = por %p237, %p238
      %p241 = scmp.ne.s32.totalorder %s224, %s240
      %p242 = scmp.eq.s32.totalorder %s35, 0
      %p243 = por %p241, %p242
      %s244 = ssub.s32 %s36, %s48
      %s245 = ssub.s32 %s37, %s44
      %s246 = sor.u32 %s244, %s245
      %p247 = scmp.eq.s32.totalorder %s246, 0
      %s249 = sadd.s32 %s248, 1
      %s250 = scalar_select %p247, %s248, %s249
      %p253 = pneg %p247
      %p254 = scmp.eq.s32.totalorder %s29, 1
      %p255 = por %p253, %p254
      %p256 = scmp.ne.s32.totalorder %s248, %s251
      %p257 = scmp.eq.s32.totalorder %s29, 0
      %p258 = por %p256, %p257
      %p259 = scmp.ne.s32.totalorder %s248, %s251
      %p260 = scmp.eq.s32.totalorder %s34, 1
      %p261 = por %p259, %p260
      %p262 = scmp.ne.s32.totalorder %s251, %s252
      %p263 = scmp.eq.s32.totalorder %s34, 0
      %p264 = por %p262, %p263
      %p265 = scmp.ne.s32.totalorder %s251, %s252
      %p266 = scmp.eq.s32.totalorder %s35, 1
      %p267 = por %p265, %p266
      %p269 = scmp.ne.s32.totalorder %s252, %s268
      %p270 = scmp.eq.s32.totalorder %s35, 0
      %p271 = por %p269, %p270
      %s272 = ssub.s32 %s36, %s48
      %s273 = ssub.s32 %s37, %s44
      %s274 = sor.u32 %s272, %s273
      %p275 = scmp.eq.s32.totalorder %s274, 0
      %s277 = sadd.s32 %s276, 1
      %s278 = scalar_select %p275, %s276, %s277
      %p281 = pneg %p275
      %p282 = scmp.eq.s32.totalorder %s29, 1
      %p283 = por %p281, %p282
      %p284 = scmp.ne.s32.totalorder %s276, %s279
      %p285 = scmp.eq.s32.totalorder %s29, 0
      %p286 = por %p284, %p285
      %p287 = scmp.ne.s32.totalorder %s276, %s279
      %p288 = scmp.eq.s32.totalorder %s34, 1
      %p289 = por %p287, %p288
      %p290 = scmp.ne.s32.totalorder %s279, %s280
      %p291 = scmp.eq.s32.totalorder %s34, 0
      %p292 = por %p290, %p291
      %p293 = scmp.ne.s32.totalorder %s279, %s280
      %p294 = scmp.eq.s32.totalorder %s35, 1
      %p295 = por %p293, %p294
      %p297 = scmp.ne.s32.totalorder %s280, %s296
      %p298 = scmp.eq.s32.totalorder %s35, 0
      %p299 = por %p297, %p298
      %s300 = ssub.s32 %s36, %s48
      %s301 = ssub.s32 %s37, %s44
      %s302 = sor.u32 %s300, %s301
      %p303 = scmp.eq.s32.totalorder %s302, 0
      %s305 = sadd.s32 %s304, 1
      %s306 = scalar_select %p303, %s304, %s305
      %p309 = pneg %p303
      %p310 = scmp.eq.s32.totalorder %s29, 1
      %p311 = por %p309, %p310
      %p312 = scmp.ne.s32.totalorder %s304, %s307
      %p313 = scmp.eq.s32.totalorder %s29, 0
      %p314 = por %p312, %p313
      %p315 = scmp.ne.s32.totalorder %s304, %s307
      %p316 = scmp.eq.s32.totalorder %s34, 1
      %p317 = por %p315, %p316
      %p318 = scmp.ne.s32.totalorder %s307, %s308
      %p319 = scmp.eq.s32.totalorder %s34, 0
      %p320 = por %p318, %p319
      %p321 = scmp.ne.s32.totalorder %s307, %s308
      %p322 = scmp.eq.s32.totalorder %s35, 1
      %p323 = por %p321, %p322
      %p325 = scmp.ne.s32.totalorder %s308, %s324
      %p326 = scmp.eq.s32.totalorder %s35, 0
      %p327 = por %p325, %p326
      %p328 = scmp.le.s32.totalorder 1, %s29
      %p329 = scmp.lt.s32.totalorder %s29, 3
      %p330 = pnand %p328, %p329
      %p331 = pneg %p330
      // Predicated region
      $region9: #{tpu_custom_call.1} parent=5 // pred_check
        _
      $region10: #{tpu_custom_call.1} parent=5 // pred_check_branch
        %333 = sbr.rel (%p330) target = $region12
      $region11: #{tpu_custom_call.1} parent=5 // pred_region
        %s334 = ssub.s32 %s29, 1
        // Predicated region
        $region13: #{tpu_custom_call.1} parent=11 // pred_check
          %p335 = pneg %p90
        $region14: #{tpu_custom_call.1} parent=11 // pred_check_branch
          %337 = sbr.rel (%p335) target = $region16
        $region15: #{tpu_custom_call.1} parent=11 // pred_region
          _
        $region16: #{tpu_custom_call.1} parent=11 // pred_fallthru
          _
        // Predicated region
        $region17: #{tpu_custom_call.1} parent=11 // pred_check
          %p338 = pneg %p111
        $region18: #{tpu_custom_call.1} parent=11 // pred_check_branch
          %340 = sbr.rel (%p338) target = $region20
        $region19: #{tpu_custom_call.1} parent=11 // pred_region
          %s342 = ssub.s32 16, 16
          %343 = vsyncadd [#allocation6], %s342
          %s345 = sshll.u32 [#allocation5], 4
          %s346 = int_to_ptr.vmem [resolvable:$true] %s345
          %348 = dma.hbm_to_vmem [thread:$0]  %s2, 16, %s346, [#allocation6]
        $region20: #{tpu_custom_call.1} parent=11 // pred_fallthru
          _
        // Predicated region
        $region21: #{tpu_custom_call.1} parent=11 // pred_check
          %p349 = pneg %p132
        $region22: #{tpu_custom_call.1} parent=11 // pred_check_branch
          %351 = sbr.rel (%p349) target = $region24
        $region23: #{tpu_custom_call.1} parent=11 // pred_region
          %s353 = ssub.s32 256, 256
          %354 = vsyncadd [#allocation6], %s353
          %s355 = sshll.u32 [#allocation7], 4
          %s356 = int_to_ptr.vmem [resolvable:$true] %s355
          %361 = dma.hbm_to_vmem [thread:$0]  %s3, 256, %s356, [#allocation6], 64, 64, 4
        $region24: #{tpu_custom_call.1} parent=11 // pred_fallthru
          _
        // Predicated region
        $region25: #{tpu_custom_call.1} parent=11 // pred_check
          %p362 = pneg %p158
        $region26: #{tpu_custom_call.1} parent=11 // pred_check_branch
          %364 = sbr.rel (%p362) target = $region28
        $region27: #{tpu_custom_call.1} parent=11 // pred_region
          %s366 = ssub.s32 128, 128
          %367 = vsyncadd [#allocation9], %s366
          %s368 = smul.addr %s39, 128
          %s369 = scalar_lea.hbm %s4, %s368
          %s371 = sshll.u32 [#allocation8], 4
          %s372 = int_to_ptr.vmem [resolvable:$true] %s371
          %374 = dma.hbm_to_vmem [thread:$0]  %s369, 128, %s372, [#allocation9]
        $region28: #{tpu_custom_call.1} parent=11 // pred_fallthru
          _
        // Predicated region
        $region29: #{tpu_custom_call.1} parent=11 // pred_check
          %p375 = pneg %p184
        $region30: #{tpu_custom_call.1} parent=11 // pred_check_branch
          %377 = sbr.rel (%p375) target = $region32
        $region31: #{tpu_custom_call.1} parent=11 // pred_region
          %p378 = scmp.lt.s32.totalorder %s39, 0
          %s379 = scalar_select %p378, %s39, 0
          %s380 = smul.addr %s379, 8
          %s381 = scalar_lea.vmem %s5, %s380
        $region32: #{tpu_custom_call.1} parent=11 // pred_fallthru
          _
        // Predicated region
        $region33: #{tpu_custom_call.1} parent=11 // pred_check
          %p382 = pneg %p210
        $region34: #{tpu_custom_call.1} parent=11 // pred_check_branch
          %384 = sbr.rel (%p382) target = $region36
        $region35: #{tpu_custom_call.1} parent=11 // pred_region
          %s386 = ssub.s32 128, 128
          %387 = vsyncadd [#allocation9], %s386
          %s388 = smul.addr %s39, 128
          %s389 = scalar_lea.hbm %s6, %s388
          %s391 = sshll.u32 [#allocation10], 4
          %s392 = int_to_ptr.vmem [resolvable:$true] %s391
          %394 = dma.hbm_to_vmem [thread:$0]  %s389, 128, %s392, [#allocation9]
        $region36: #{tpu_custom_call.1} parent=11 // pred_fallthru
          _
        // Predicated region
        $region37: #{tpu_custom_call.1} parent=11 // pred_check
          %p395 = pneg %p236
        $region38: #{tpu_custom_call.1} parent=11 // pred_check_branch
          %397 = sbr.rel (%p395) target = $region40
        $region39: #{tpu_custom_call.1} parent=11 // pred_region
          %s399 = ssub.s32 128, 128
          %400 = vsyncadd [#allocation12], %s399
          %s401 = smul.addr %s39, 128
          %s402 = scalar_lea.hbm %s7, %s401
          %s404 = sshll.u32 [#allocation11], 4
          %s405 = int_to_ptr.vmem [resolvable:$true] %s404
          %407 = dma.hbm_to_vmem [thread:$0]  %s402, 128, %s405, [#allocation12]
        $region40: #{tpu_custom_call.1} parent=11 // pred_fallthru
          _
      $region12: #{tpu_custom_call.1} parent=5 // pred_fallthru
        _
      %p408 = scmp.lt.s32.totalorder %s29, 2
      // Predicated region
      $region41: #{tpu_custom_call.1} parent=5 // pred_check
        %p409 = pneg %p408
      $region42: #{tpu_custom_call.1} parent=5 // pred_check_branch
        %411 = sbr.rel (%p409) target = $region44
      $region43: #{tpu_custom_call.1} parent=5 // pred_region
        // Predicated region
        $region45: #{tpu_custom_call.1} parent=43 // pred_check
          %p412 = pneg %p63
        $region46: #{tpu_custom_call.1} parent=43 // pred_check_branch
          %414 = sbr.rel (%p412) target = $region48
        $region47: #{tpu_custom_call.1} parent=43 // pred_region
          %s415 = sand.u32 %s53, 1
          %s416 = scalar_lea.sflag [#allocation3], %s415
          %s417 = sand.u32 %s53, 1
          %s418 = smul.addr %s417, 8
          %s419 = scalar_lea.vmem [#allocation2], %s418
          %s421 = ssub.s32 128, 128
          %422 = vsyncadd %s416, %s421
          %s423 = sadd.s32 %s37, %s36
          %s424 = smul.addr %s423, 128
          %s425 = scalar_lea.hbm %s0, %s424
          %s427 = sshll.u32 %s419, 4
          %s428 = int_to_ptr.vmem [resolvable:$true] %s427
          %430 = dma.hbm_to_vmem [thread:$0]  %s425, 128, %s428, %s416
        $region48: #{tpu_custom_call.1} parent=43 // pred_fallthru
          _
      $region44: #{tpu_custom_call.1} parent=5 // pred_fallthru
        _
      %p431 = scmp.le.s32.totalorder 1, %s29
      %p432 = scmp.lt.s32.totalorder %s29, 3
      %p433 = pnand %p431, %p432
      %p434 = pneg %p433
      // Predicated region
      $region49: #{tpu_custom_call.1} parent=5 // pred_check
        _
      $region50: #{tpu_custom_call.1} parent=5 // pred_check_branch
        %436 = sbr.rel (%p433) target = $region52
      $region51: #{tpu_custom_call.1} parent=5 // pred_region
        %s437 = ssub.s32 %s29, 1
        %s438 = sand.u32 %s56, 1
        %s439 = scalar_lea.sflag [#allocation3], %s438
        %s440 = sand.u32 %s56, 1
        %s441 = smul.addr %s440, 8
        %s442 = scalar_lea.vmem [#allocation2], %s441
        // Predicated region
        $region53: #{tpu_custom_call.1} parent=51 // pred_check
          %p443 = pneg %p69
        $region54: #{tpu_custom_call.1} parent=51 // pred_check_branch
          %445 = sbr.rel (%p443) target = $region56
        $region55: #{tpu_custom_call.1} parent=51 // pred_region
          %446 = dma.done %s439, 128
        $region56: #{tpu_custom_call.1} parent=51 // pred_fallthru
          _
        // Predicated region
        $region57: #{tpu_custom_call.1} parent=51 // pred_check
          %p447 = pneg %p111
        $region58: #{tpu_custom_call.1} parent=51 // pred_check_branch
          %449 = sbr.rel (%p447) target = $region60
        $region59: #{tpu_custom_call.1} parent=51 // pred_region
          %450 = dma.done [#allocation6], 16
        $region60: #{tpu_custom_call.1} parent=51 // pred_fallthru
          _
        // Predicated region
        $region61: #{tpu_custom_call.1} parent=51 // pred_check
          %p451 = pneg %p132
        $region62: #{tpu_custom_call.1} parent=51 // pred_check_branch
          %453 = sbr.rel (%p451) target = $region64
        $region63: #{tpu_custom_call.1} parent=51 // pred_region
          %454 = dma.done [#allocation6], 256
        $region64: #{tpu_custom_call.1} parent=51 // pred_fallthru
          _
        // Predicated region
        $region65: #{tpu_custom_call.1} parent=51 // pred_check
          %p455 = pneg %p158
        $region66: #{tpu_custom_call.1} parent=51 // pred_check_branch
          %457 = sbr.rel (%p455) target = $region68
        $region67: #{tpu_custom_call.1} parent=51 // pred_region
          %458 = dma.done [#allocation9], 128
        $region68: #{tpu_custom_call.1} parent=51 // pred_fallthru
          _
        // Predicated region
        $region69: #{tpu_custom_call.1} parent=51 // pred_check
          %p459 = pneg %p210
        $region70: #{tpu_custom_call.1} parent=51 // pred_check_branch
          %461 = sbr.rel (%p459) target = $region72
        $region71: #{tpu_custom_call.1} parent=51 // pred_region
          %462 = dma.done [#allocation9], 128
        $region72: #{tpu_custom_call.1} parent=51 // pred_fallthru
          _
        // Predicated region
        $region73: #{tpu_custom_call.1} parent=51 // pred_check
          %p463 = pneg %p236
        $region74: #{tpu_custom_call.1} parent=51 // pred_check_branch
          %465 = sbr.rel (%p463) target = $region76
        $region75: #{tpu_custom_call.1} parent=51 // pred_region
          %466 = dma.done [#allocation12], 128
        $region76: #{tpu_custom_call.1} parent=51 // pred_fallthru
          _
        %s467 = sand.u32 %s56, 1
        %s468 = scalar_lea.sflag [#allocation3], %s467
        %s469 = sand.u32 %s56, 1
        %s470 = smul.addr %s469, 8
        %s471 = scalar_lea.vmem [#allocation2], %s470
        %p472 = pneg %p69
        %p473 = pneg %p66
        %p474 = pneg %p90
        %p475 = pneg %p87
        %p476 = pneg %p111
        %p477 = pneg %p108
        %p478 = pneg %p132
        %p479 = pneg %p129
        %p480 = pneg %p158
        %p481 = pneg %p155
        %p482 = scmp.lt.s32.totalorder %s39, 0
        %s483 = scalar_select %p482, %s39, 0
        %s484 = smul.addr %s483, 8
        %s485 = scalar_lea.vmem %s5, %s484
        %p486 = pneg %p184
        %p487 = pneg %p181
        %p488 = pneg %p210
        %p489 = pneg %p207
        %p490 = pneg %p236
        %p491 = pneg %p233
        %p492 = pneg %p264
        %p493 = pneg %p261
        %s494 = sand.u32 %s251, 1
        %s495 = scalar_lea.sflag [#allocation4], %s494
        %s496 = sand.u32 %s251, 1
        %s497 = smul.addr %s496, 4
        %s498 = scalar_lea.vmem [#allocation13], %s497
        %p499 = pneg %p292
        %p500 = pneg %p289
        %s501 = sand.u32 %s34, 1
        %s502 = scalar_lea.sflag [#allocation15], %s501
        %s503 = sand.u32 %s279, 1
        %s504 = smul.addr %s503, 4
        %s505 = scalar_lea.vmem [#allocation14], %s504
        %p506 = pneg %p320
        %p507 = pneg %p317
        %s508 = sand.u32 %s34, 1
        %s509 = scalar_lea.sflag [#allocation15], %s508
        %s510 = sand.u32 %s307, 1
        %s511 = smul.addr %s510, 4
        %s512 = scalar_lea.vmem [#allocation16], %s511
        %p513 = scmp.lt.s32.totalorder %s39, 0
        %s514 = scalar_select %p513, %s39, 0
        %s515 = smul.addr %s514, 8
        %s516 = scalar_lea.vmem %s5, %s515
        %v518 = vld [vmem:[%s442] sm:$0xff]
        %v519 = vld [vmem:[%s1] sm:$0x1]
        %v520 = vld [vmem:[#allocation5] sm:$0x1]
        %vm521 = vcmask 261120
        %v522 = vsel %vm521, %v518, 0.0
        %523 = vadd.xlane.f32.xlu0 %v522
        %v524 = vpop.xlane.xlu0 %523
        %v525 = vrcp.pop 32.0
        %v526 = vmul.f32 %v524, %v525
        %v527 = vsub.f32 %v518, %v526
        %v528 = vmul.f32 %v527, %v527
        %v529 = vsel %vm521, %v528, 0.0
        %530 = vadd.xlane.f32.xlu0 %v529
        %v531 = vpop.xlane.xlu0 %530
        %v532 = vmul.f32 %v531, %v525
        %v533 = vadd.f32 %v532, 1e-05
        %v534 = vrsqrt.pop %v533
        %v535 = vmul.f32 %v527, %v534
        %v537 = vlaneseq
        %v538 = vshrl.u32 %v537, 7
        %v539 = vsub.s32 0, %v538
        %v540 = vrot.slane %v519, %v539
        %v542 = vmul.f32 %v535, %v540
        %v544 = vlaneseq
        %v545 = vshrl.u32 %v544, 7
        %v546 = vsub.s32 0, %v545
        %v547 = vrot.slane %v520, %v546
        %v549 = vadd.f32 %v542, %v547
        %v550 = vpack.c.bf16 %v549, %v549
        %v551 = vld [vmem:[#allocation7] sm:$0xf]
        %v552 = vld [vmem:[#allocation7 + $0x4] sm:$0xf]
        %v553 = vld [vmem:[#allocation7 + $0x8] sm:$0xf]
        %v554 = vld [vmem:[#allocation7 + $0xc] sm:$0xf]
        %v559 = vunpack.c.l.b16 %v551
        %v560 = vunpack.c.l.b16 %v552
        %v561 = vunpack.c.l.b16 %v553
        %v562 = vunpack.c.l.b16 %v554
        %v563 = vpack.c.b16 %v560, %v559
        %v564 = vpack.c.b16 %v562, %v561
        %v568 = vsel %vm521, %v550, 0
        %570 = vmatprep.subr.bf16.mxu0 0
        %571 = vmatpush1.bf16.msra.mxu0 0
        %572 = vmatprep.subr.bf16.mxu0 0
        %573 = vmatpush1.bf16.msra.mxu0 0
        %574 = vmatprep.subr.bf16.mxu0 0
        %575 = vmatpush1.bf16.msra.mxu0 0
        %576 = vmatprep.subr.bf16.mxu0 0
        %577 = vmatpush1.bf16.msra.mxu0 0
        %578 = vmatprep.subr.bf16.mxu0 0
        %579 = vmatpush1.bf16.msra.mxu0 0
        %580 = vmatprep.subr.bf16.mxu0 0
        %581 = vmatpush1.bf16.msra.mxu0 0
        %582 = vmatprep.subr.bf16.mxu0 0
        %583 = vmatpush1.bf16.msra.mxu0 %v564
        %584 = vmatprep.subr.bf16.mxu0 0
        %585 = vmatpush1.bf16.msra.mxu0 %v563
        %586 = vmatprep.subr.bf16.mxu0 0
        %587 = vmatpush2.bf16.msra.mxu0 0
        %588 = vmatprep.subr.bf16.mxu0 0
        %589 = vmatpush2.bf16.msra.mxu0 0
        %590 = vmatprep.subr.bf16.mxu0 0
        %591 = vmatpush2.bf16.msra.mxu0 0
        %592 = vmatprep.subr.bf16.mxu0 0
        %593 = vmatpush2.bf16.msra.mxu0 0
        %594 = vmatprep.subr.bf16.mxu0 0
        %595 = vmatpush2.bf16.msra.mxu0 0
        %596 = vmatprep.subr.bf16.mxu0 0
        %597 = vmatpush2.bf16.msra.mxu0 0
        %598 = vmatprep.subr.bf16.mxu0 0
        %599 = vmatpush2.bf16.msra.mxu0 0
        %600 = vmatprep.subr.bf16.mxu0 0
        %601 = vmatpush2.bf16.msra.mxu0 0
        %602 = vmatprep.mubr.bf16.mxu0 0
        %603 = vmatmul.mubr.bf16.gmra.mxu0 %v568
        %v604 = vpop.f32.mrf.mxu0
        %v605 = vadd.f32 0.0, %v604
        %v606 = vpop.f32.mrf.mxu0
        %v607 = vpop.f32.mrf.mxu0
        %v608 = vpop.f32.mrf.mxu0
        %609 = vdwg.mxu0
        %v610 = vld [vmem:[#allocation8] sm:$0xff]
        %v611 = vmul.f32 %v605, %v610
        %613 = vrot.lane.b32.xlu0 %v605, 127
        %v614 = vpop.permute.xlu0 %613
        %616 = vrot.lane.b32.xlu0 %v605, 31
        %v617 = vpop.permute.xlu0 %616
        %vm619 = vcmask 252928
        %v620 = vsel %vm619, %v614, %v617
        %621 = vrot.lane.b32.xlu0 %v605, 97
        %v622 = vpop.permute.xlu0 %621
        %624 = vrot.lane.b32.xlu0 %v605, 1
        %v625 = vpop.permute.xlu0 %624
        %vm627 = vcmask 7168
        %v628 = vsel %vm627, %v622, %v625
        %v629 = vlaneseq
        %v630 = vand.u32 %v629, 127
        %vm631 = vcmp.lt.s32.totalorder %v630, 0
        %v632 = vsub.s32 0, %v630
        %v633 = vsel %vm631, %v632, %v630
        %v634 = vshrl.u32 %v633, 1
        %v635 = vand.u32 %v633, 1
        %v636 = vsub.s32 0, %v635
        %v637 = vsel %vm631, %v636, %v635
        %vm638 = vcmp.ne.s32.totalorder %v637, 0
        %vm639 = vcmp.lt.s32.totalorder %v637, 0
        %vm640 = vmand %vm639, %vm638
        %v641 = vadd.s32 %v637, 2
        %v642 = vsel %vm640, %v641, %v637
        %vm643 = vcmp.eq.s32.totalorder %v642, 0
        %v644 = vsub.f32 0.0, %v620
        %v645 = vsel %vm643, %v644, %v628
        %v646 = vld [vmem:[%s516] sm:$0xff]
        %v647 = vmul.f32 %v645, %v646
        %v648 = vadd.f32 %v611, %v647
        %v649 = vld [vmem:[#allocation10] sm:$0xff]
        %651 = vrot.lane.b32.xlu0 %v649, 32
        %v652 = vpop.permute.xlu0 %651
        %v654 = vmul.f32 %v605, %v652
        %655 = vrot.lane.b32.xlu0 %v605, 95
        %v656 = vpop.permute.xlu0 %655
        %v658 = vsel %vm619, %v656, %v614
        %659 = vrot.lane.b32.xlu0 %v605, 65
        %v660 = vpop.permute.xlu0 %659
        %v662 = vsel %vm627, %v660, %v622
        %v663 = vsub.f32 0.0, %v658
        %v664 = vsel %vm643, %v663, %v662
        %v665 = vld [vmem:[#allocation11] sm:$0xff]
        %v666 = vmul.f32 %v664, %v665
        %668 = vrot.lane.b32.xlu0 %v666, 32
        %v669 = vpop.permute.xlu0 %668
        %v671 = vadd.f32 %v654, %v669
        %v672 = vpack.c.bf16 %v648, %v648
        %vm673 = vcmask 257024
        %674 = vst.msk [vmem:[%s498] sm:$0xf] %vm673, %v672
        %v675 = vpack.c.bf16 %v671, %v671
        %v677 = vunpack.c.l.b16 %v675
        %v678 = vpack.c.b16 %v677, %v677
        %679 = vrot.lane.b32.xlu0 %v678, 96
        %v680 = vpop.permute.xlu0 %679
        %682 = vst.msk [vmem:[%s505] sm:$0xf] %vm673, %v680
        %v683 = vpack.c.bf16 %v605, %v605
        %v685 = vunpack.c.l.b16 %v683
        %v686 = vpack.c.b16 %v685, %v685
        %687 = vrot.lane.b32.xlu0 %v686, 64
        %v688 = vpop.permute.xlu0 %687
        %690 = vst.msk [vmem:[%s512] sm:$0xf] %vm673, %v688
        %s691 = sand.u32 %s251, 1
        %s692 = scalar_lea.sflag [#allocation4], %s691
        %s693 = sand.u32 %s251, 1
        %s694 = smul.addr %s693, 4
        %s695 = scalar_lea.vmem [#allocation13], %s694
        %s696 = sand.u32 %s34, 1
        %s697 = scalar_lea.sflag [#allocation15], %s696
        %s698 = sand.u32 %s279, 1
        %s699 = smul.addr %s698, 4
        %s700 = scalar_lea.vmem [#allocation14], %s699
        %s701 = sand.u32 %s34, 1
        %s702 = scalar_lea.sflag [#allocation15], %s701
        %s703 = sand.u32 %s307, 1
        %s704 = smul.addr %s703, 4
        %s705 = scalar_lea.vmem [#allocation16], %s704
        // Predicated region
        $region77: #{tpu_custom_call.1} parent=51 // pred_check
          %p706 = pneg %p261
        $region78: #{tpu_custom_call.1} parent=51 // pred_check_branch
          %708 = sbr.rel (%p706) target = $region80
        $region79: #{tpu_custom_call.1} parent=51 // pred_region
          %s710 = ssub.s32 64, 64
          %711 = vsyncadd %s692, %s710
          %s712 = sadd.s32 %s39, %s38
          %s713 = smul.addr %s712, 64
          %s714 = scalar_lea.hbm %s8, %s713
          %s716 = sshll.u32 %s695, 4
          %s717 = int_to_ptr.vmem [resolvable:$true] %s716
          %719 = dma.vmem_to_hbm [thread:$0]  %s717, 64, %s714, %s692
        $region80: #{tpu_custom_call.1} parent=51 // pred_fallthru
          _
        // Predicated region
        $region81: #{tpu_custom_call.1} parent=51 // pred_check
          %p720 = pneg %p289
        $region82: #{tpu_custom_call.1} parent=51 // pred_check_branch
          %722 = sbr.rel (%p720) target = $region84
        $region83: #{tpu_custom_call.1} parent=51 // pred_region
          %s724 = ssub.s32 64, 64
          %725 = vsyncadd %s697, %s724
          %s726 = sadd.s32 %s39, %s38
          %s727 = smul.addr %s726, 64
          %s728 = scalar_lea.hbm %s9, %s727
          %s730 = sshll.u32 %s700, 4
          %s731 = int_to_ptr.vmem [resolvable:$true] %s730
          %733 = dma.vmem_to_hbm [thread:$0]  %s731, 64, %s728, %s697
        $region84: #{tpu_custom_call.1} parent=51 // pred_fallthru
          _
        // Predicated region
        $region85: #{tpu_custom_call.1} parent=51 // pred_check
          %p734 = pneg %p317
        $region86: #{tpu_custom_call.1} parent=51 // pred_check_branch
          %736 = sbr.rel (%p734) target = $region88
        $region87: #{tpu_custom_call.1} parent=51 // pred_region
          %s738 = ssub.s32 64, 64
          %739 = vsyncadd %s702, %s738
          %s740 = sadd.s32 %s39, %s38
          %s741 = smul.addr %s740, 64
          %s742 = scalar_lea.hbm %s10, %s741
          %s744 = sshll.u32 %s705, 4
          %s745 = int_to_ptr.vmem [resolvable:$true] %s744
          %747 = dma.vmem_to_hbm [thread:$0]  %s745, 64, %s742, %s702
        $region88: #{tpu_custom_call.1} parent=51 // pred_fallthru
          _
      $region52: #{tpu_custom_call.1} parent=5 // pred_fallthru
        _
      %p748 = scmp.le.s32.totalorder 2, %s29
      // Predicated region
      $region89: #{tpu_custom_call.1} parent=5 // pred_check
        %p749 = pneg %p748
      $region90: #{tpu_custom_call.1} parent=5 // pred_check_branch
        %751 = sbr.rel (%p749) target = $region92
      $region91: #{tpu_custom_call.1} parent=5 // pred_region
        %s752 = ssub.s32 %s29, 2
        // Predicated region
        $region93: #{tpu_custom_call.1} parent=91 // pred_check
          %p753 = pneg %p267
        $region94: #{tpu_custom_call.1} parent=91 // pred_check_branch
          %755 = sbr.rel (%p753) target = $region96
        $region95: #{tpu_custom_call.1} parent=91 // pred_region
          %s756 = sand.u32 %s252, 1
          %s757 = scalar_lea.sflag [#allocation4], %s756
          %s758 = sand.u32 %s252, 1
          %s759 = smul.addr %s758, 4
          %s760 = scalar_lea.vmem [#allocation13], %s759
          %761 = dma.done %s757, 64
        $region96: #{tpu_custom_call.1} parent=91 // pred_fallthru
          _
        // Predicated region
        $region97: #{tpu_custom_call.1} parent=91 // pred_check
          %p762 = pneg %p295
        $region98: #{tpu_custom_call.1} parent=91 // pred_check_branch
          %764 = sbr.rel (%p762) target = $region100
        $region99: #{tpu_custom_call.1} parent=91 // pred_region
          %s765 = sand.u32 %s35, 1
          %s766 = scalar_lea.sflag [#allocation15], %s765
          %s767 = sand.u32 %s280, 1
          %s768 = smul.addr %s767, 4
          %s769 = scalar_lea.vmem [#allocation14], %s768
          %770 = dma.done %s766, 64
        $region100: #{tpu_custom_call.1} parent=91 // pred_fallthru
          _
        // Predicated region
        $region101: #{tpu_custom_call.1} parent=91 // pred_check
          %p771 = pneg %p323
        $region102: #{tpu_custom_call.1} parent=91 // pred_check_branch
          %773 = sbr.rel (%p771) target = $region104
        $region103: #{tpu_custom_call.1} parent=91 // pred_region
          %s774 = sand.u32 %s35, 1
          %s775 = scalar_lea.sflag [#allocation15], %s774
          %s776 = sand.u32 %s308, 1
          %s777 = smul.addr %s776, 4
          %s778 = scalar_lea.vmem [#allocation16], %s777
          %779 = dma.done %s775, 64
        $region104: #{tpu_custom_call.1} parent=91 // pred_fallthru
          _
      $region92: #{tpu_custom_call.1} parent=5 // pred_fallthru
        _
    $region6: #{tpu_custom_call.1} parent=1 // loop_footer
      %s33 = sadd.s32 1, %s29
    $region7: #{tpu_custom_call.1} parent=1 // loop_footer_branch
      %28 = sbr.rel target = $region3
    $region8: #{tpu_custom_call.1} parent=1 // loop_exit
      _
    %780 = vsyncpa [#allocation3], 1
    %s781 = scalar_lea.sflag [#allocation3], 1
    %782 = vsyncpa %s781, 1
    %783 = vsyncpa [#allocation6], 1
    %784 = vsyncpa [#allocation9], 1
    %785 = vsyncpa [#allocation12], 1
    %786 = vsyncpa [#allocation4], 1
    %s787 = scalar_lea.sflag [#allocation4], 1
    %788 = vsyncpa %s787, 1
    %789 = vsyncpa [#allocation15], 1
    %s790 = scalar_lea.sflag [#allocation15], 1
    %791 = vsyncpa %s790, 1

</llo_original>
